<compile_context>
chip_gen: v6e
topology: v6e:2x2x1
jax: 0.10.0
libtpu: 0.0.40
codegen_flags: <defaults>
</compile_context>

<pallas_src>
import jax
import jax.numpy as jnp
from jax.experimental import pallas as pl
from jax.experimental.pallas import tpu as pltpu


def _round_up(a, b):
    return ((a + b - 1) // b) * b


def _tpu_hw():
    """Best-effort hardware query (VMEM capacity, TensorCores per device).

    Falls back to conservative defaults if the query is unavailable."""
    vmem_bytes = 128 * 1024 * 1024
    num_tc = 1
    try:
        info = pltpu.get_tpu_info()
        vmem_bytes = int(getattr(info, "vmem_capacity_bytes", vmem_bytes))
        for attr in ("num_tensorcores", "tensor_cores_per_chip",
                     "cores_per_chip", "num_cores"):
            v = getattr(info, attr, None)
            if v:
                num_tc = int(v)
                break
    except Exception:
        pass
    return vmem_bytes, num_tc


def _vmem_bytes(tile, in_dim, hid, out_dim):
    """Rough per-step VMEM footprint: double-buffered I/O blocks + resident
    weights + live f32/bf16 intermediates."""
    x_blk = tile * in_dim * 4                      # f32 input block
    o_blk = out_dim * tile * 4                     # f32 output block
    weights = (hid * in_dim + hid * hid + out_dim * hid) * 2 \
        + (2 * hid + out_dim) * 4
    inter = in_dim * tile * 2 + hid * tile * (4 + 2) + out_dim * tile * 4
    return 2 * (x_blk + o_blk) + weights + inter


def _decoder_mlp_kernel(x_ref, w0T_ref, b0_ref, w1T_ref, b1_ref, w2T_ref,
                        b2_ref, oT_ref):
    """Fused MLP, feature-major compute.

    out^T = W2^T @ relu(W1^T @ relu(W0^T @ x^T + b0) + b1) + b2
    x arrives in natural [tile, in_dim] layout; the bf16 cast + transpose to
    [in_dim, tile] happen here (XLU), so the wrapper never touches HBM.
    bf16 MXU operands, f32 accumulation, f32 bias/ReLU.
    """
    xT = x_ref[...].astype(jnp.bfloat16).T                        # (in, tile)
    h = jnp.dot(w0T_ref[...], xT, preferred_element_type=jnp.float32)
    h = jnp.maximum(h + b0_ref[...], 0.0)                          # (hid, tile) f32
    h = jnp.dot(w1T_ref[...], h.astype(jnp.bfloat16),
                preferred_element_type=jnp.float32)
    h = jnp.maximum(h + b1_ref[...], 0.0)                          # (hid, tile) f32
    o = jnp.dot(w2T_ref[...], h.astype(jnp.bfloat16),
                preferred_element_type=jnp.float32)
    oT_ref[...] = (o + b2_ref[...]).astype(oT_ref.dtype)           # (out, tile)


def decoder_forward(node_features, params, *, tile_nodes=4096,
                    feature_major_output=False):
    """Decoder.forward: 3-layer MLP applied to node_features [N, in_dim].

    Returns [N, out_dim] (module layout) or [out_dim, N] if
    feature_major_output=True (skips the final transpose pass)."""
    n, in_dim = node_features.shape
    hidden = params["w0"].shape[1]
    out_dim = params["w2"].shape[1]
    out_dtype = node_features.dtype

    vmem_cap, num_tc = _tpu_hw()
    vmem_limit = int(min(64 * 1024 * 1024, (vmem_cap * 3) // 4))

    # ---- hidden sits on the sublane/contraction axis: pad only to the bf16
    #      sublane multiple (16).  hidden=64 => no-op. ----
    hid_pad = _round_up(hidden, 16)
    ph = hid_pad - hidden
    w0T = jnp.pad(params["w0"], ((0, 0), (0, ph))).T.astype(jnp.bfloat16)   # (hid, in)
    w1T = jnp.pad(params["w1"], ((0, ph), (0, ph))).T.astype(jnp.bfloat16)  # (hid, hid)
    w2T = jnp.pad(params["w2"], ((0, ph), (0, 0))).T.astype(jnp.bfloat16)   # (out, hid)
    b0T = jnp.pad(params["b0"], ((0, 0), (0, ph))).T.astype(jnp.float32)    # (hid, 1)
    b1T = jnp.pad(params["b1"], ((0, 0), (0, ph))).T.astype(jnp.float32)    # (hid, 1)
    b2T = params["b2"].T.astype(jnp.float32)                                # (out, 1)

    # ---- node tile: big (amortize grid-step overhead), multiple of 128,
    #      clamped for small graphs.  Split into >=2 (even) steps only when the
    #      chip actually has >1 TensorCore to feed (v7x). ----
    n_pad128 = _round_up(max(n, 1), 128)
    tile = max(128, min(_round_up(int(tile_nodes), 128), n_pad128))
    if num_tc > 1 and n_pad128 >= 256:
        steps = pl.cdiv(n_pad128, tile)
        if steps < 2 or steps % 2:
            steps = max(2, steps + (steps % 2))
            tile = max(128, _round_up(pl.cdiv(n_pad128, steps), 128))
    # Clamp against the VMEM budget (leave headroom for double buffering).
    while tile > 128 and _vmem_bytes(tile, in_dim, hid_pad, out_dim) > (vmem_limit * 3) // 5:
        tile = max(128, _round_up(tile // 2, 128))
    grid = (pl.cdiv(n, tile),)

    in_specs = [
        pl.BlockSpec((tile, in_dim), lambda i: (i, 0)),        # x, natural layout
        pl.BlockSpec((hid_pad, in_dim), lambda i: (0, 0)),     # W0^T (resident)
        pl.BlockSpec((hid_pad, 1), lambda i: (0, 0)),          # b0
        pl.BlockSpec((hid_pad, hid_pad), lambda i: (0, 0)),    # W1^T (resident)
        pl.BlockSpec((hid_pad, 1), lambda i: (0, 0)),          # b1
        pl.BlockSpec((out_dim, hid_pad), lambda i: (0, 0)),    # W2^T (resident)
        pl.BlockSpec((out_dim, 1), lambda i: (0, 0)),          # b2
    ]
    out_spec = pl.BlockSpec((out_dim, tile), lambda i: (0, i))  # lane-dense out^T

    n_work = grid[0] * tile
    flops = 2 * n_work * (in_dim * hid_pad + hid_pad * hid_pad + hid_pad * out_dim)
    bytes_accessed = (
        n * in_dim * 4 + n * out_dim * 4
        + (w0T.size + w1T.size + w2T.size) * 2
        + (b0T.size + b1T.size + b2T.size) * 4)

    oT = pl.pallas_call(
        _decoder_mlp_kernel,
        out_shape=jax.ShapeDtypeStruct((out_dim, n), out_dtype),
        grid=grid,
        in_specs=in_specs,
        out_specs=out_spec,
        compiler_params=pltpu.CompilerParams(
            dimension_semantics=("parallel",),
            vmem_limit_bytes=vmem_limit),
        cost_estimate=pl.CostEstimate(
            flops=flops, transcendentals=0, bytes_accessed=bytes_accessed),
    )(node_features, w0T, b0T, w1T, b1T, w2T, b2T)

    if feature_major_output:
        return oT            # [out_dim, N]: no extra pass for layout-flexible consumers
    return oT.T              # [N, out_dim]: matches the PyTorch module's layout


def make_mlp_params(key, in_dim, hidden, out_dim):
    """MLP params: Linear(in,h) -> ReLU -> Linear(h,h) -> ReLU -> Linear(h,out)."""
    k0, k1, k2 = jax.random.split(key, 3)

    def _linear(k, fan_in, fan_out):
        # Matches torch.nn.Linear default init (uniform +/- 1/sqrt(fan_in)).
        bound = 1.0 / jnp.sqrt(fan_in)
        kw, kb = jax.random.split(k)
        w = jax.random.uniform(kw, (fan_in, fan_out), jnp.float32, -bound, bound)
        b = jax.random.uniform(kb, (1, fan_out), jnp.float32, -bound, bound)
        return w, b

    w0, b0 = _linear(k0, in_dim, hidden)
    w1, b1 = _linear(k1, hidden, hidden)
    w2, b2 = _linear(k2, hidden, out_dim)
    return {"w0": w0, "b0": b0, "w1": w1, "b1": b1, "w2": w2, "b2": b2}


def _reference_mixed(x, p):
    """XLA reference with the kernel's numerical recipe
    (bf16 operands, f32 accumulation, f32 bias/ReLU)."""
    bf, f32 = jnp.bfloat16, jnp.float32
    h = jnp.dot(x.astype(bf), p["w0"].astype(bf),
                preferred_element_type=f32) + p["b0"]
    h = jnp.maximum(h, 0.0)
    h = jnp.dot(h.astype(bf), p["w1"].astype(bf),
                preferred_element_type=f32) + p["b1"]
    h = jnp.maximum(h, 0.0)
    return jnp.dot(h.astype(bf), p["w2"].astype(bf),
                   preferred_element_type=f32) + p["b2"]


def _reference_f32(x, p):
    """Full-f32 reference matching the original PyTorch module."""
    h = jnp.maximum(x @ p["w0"] + p["b0"], 0.0)
    h = jnp.maximum(h @ p["w1"] + p["b1"], 0.0)
    return h @ p["w2"] + p["b2"]


if __name__ == "__main__":
    key = jax.random.PRNGKey(0)
    k_feat, k_params = jax.random.split(key)

    # Small graph-like example: 300 nodes (deliberately not tile-aligned),
    # 32 input features, hidden 64, 16 decoded outputs.
    N, IN_DIM, HIDDEN, OUT_DIM = 300, 32, 64, 16

    # "graph.node_features"
    node_features = jax.random.normal(k_feat, (N, IN_DIM), jnp.float32)
    params = make_mlp_params(k_params, IN_DIM, HIDDEN, OUT_DIM)

    out = decoder_forward(node_features, params)
    out = jax.block_until_ready(out)
    assert out.shape == (N, OUT_DIM)

    # Tight check vs. an XLA implementation of the same mixed-precision recipe.
    ref_mixed = _reference_mixed(node_features, params)
    assert jnp.allclose(out, ref_mixed, atol=1e-3, rtol=1e-3), \
        "mismatch vs mixed-precision reference"

    # Sanity check vs. the original full-f32 MLP (bf16 operands => loose tol).
    ref_f32 = _reference_f32(node_features, params)
    assert jnp.allclose(out, ref_f32, atol=1e-1, rtol=1e-1), \
        "mismatch vs f32 reference"

    print("KERNEL_OK")
</pallas_src>

<mosaic_0001>
module attributes {stable_mosaic.version = 11 : i64} {
  func.func @_decoder_mlp_kernel(%arg0: i32, %arg1: memref<384x32xf32, #tpu.memory_space<vmem>>, %arg2: memref<64x32xbf16, #tpu.memory_space<vmem>>, %arg3: memref<64x1xf32, #tpu.memory_space<vmem>>, %arg4: memref<64x64xbf16, #tpu.memory_space<vmem>>, %arg5: memref<64x1xf32, #tpu.memory_space<vmem>>, %arg6: memref<16x64xbf16, #tpu.memory_space<vmem>>, %arg7: memref<16x1xf32, #tpu.memory_space<vmem>>, %arg8: memref<16x384xf32, #tpu.memory_space<vmem>>) attributes {dimension_semantics = [#tpu.dimension_semantics<parallel>], iteration_bounds = array<i64: 1>, scalar_prefetch = 0 : i64, scratch_operands = 0 : i64, tpu.core_type = #tpu.core_type<tc>, window_params = [{transform_indices = @transform_0, window_bounds = array<i64: 384, 32>}, {pipeline_mode = #tpu.pipeline_mode<synchronous>, transform_indices = @transform_1, window_bounds = array<i64: 64, 32>}, {pipeline_mode = #tpu.pipeline_mode<synchronous>, transform_indices = @transform_2, window_bounds = array<i64: 64, 1>}, {pipeline_mode = #tpu.pipeline_mode<synchronous>, transform_indices = @transform_3, window_bounds = array<i64: 64, 64>}, {pipeline_mode = #tpu.pipeline_mode<synchronous>, transform_indices = @transform_4, window_bounds = array<i64: 64, 1>}, {pipeline_mode = #tpu.pipeline_mode<synchronous>, transform_indices = @transform_5, window_bounds = array<i64: 16, 64>}, {pipeline_mode = #tpu.pipeline_mode<synchronous>, transform_indices = @transform_6, window_bounds = array<i64: 16, 1>}, {transform_indices = @transform_7, window_bounds = array<i64: 16, 384>}]} {
    %c0 = arith.constant 0 : index
    %c0_0 = arith.constant 0 : index
    %0 = vector.load %arg1[%c0, %c0_0] : memref<384x32xf32, #tpu.memory_space<vmem>>, vector<384x32xf32>
    %1 = arith.truncf %0 : vector<384x32xf32> to vector<384x32xbf16>
    %2 = tpu.transpose %1, [1, 0] : vector<384x32xbf16> -> vector<32x384xbf16>
    %c0_1 = arith.constant 0 : index
    %c0_2 = arith.constant 0 : index
    %3 = vector.load %arg2[%c0_1, %c0_2] : memref<64x32xbf16, #tpu.memory_space<vmem>>, vector<64x32xbf16>
    %cst = arith.constant dense<0.000000e+00> : vector<64x384xf32>
    %4 = tpu.matmul %3, %2, %cst {dimension_numbers = #tpu.dot_dimension_numbers<[1], [0], [0], [1], [0, 0, 1, 1], [], []>} : vector<64x32xbf16>, vector<32x384xbf16>, vector<64x384xf32> -> vector<64x384xf32>
    %c0_3 = arith.constant 0 : index
    %c0_4 = arith.constant 0 : index
    %5 = vector.load %arg3[%c0_3, %c0_4] : memref<64x1xf32, #tpu.memory_space<vmem>>, vector<64x1xf32>
    %6 = vector.broadcast %5 : vector<64x1xf32> to vector<64x384xf32>
    %7 = arith.addf %4, %6 : vector<64x384xf32>
    %cst_5 = arith.constant 0.000000e+00 : f32
    %8 = vector.broadcast %cst_5 : f32 to vector<64x384xf32>
    %9 = arith.maximumf %7, %8 : vector<64x384xf32>
    %c0_6 = arith.constant 0 : index
    %c0_7 = arith.constant 0 : index
    %10 = vector.load %arg4[%c0_6, %c0_7] : memref<64x64xbf16, #tpu.memory_space<vmem>>, vector<64x64xbf16>
    %11 = arith.truncf %9 : vector<64x384xf32> to vector<64x384xbf16>
    %cst_8 = arith.constant dense<0.000000e+00> : vector<64x384xf32>
    %12 = tpu.matmul %10, %11, %cst_8 {dimension_numbers = #tpu.dot_dimension_numbers<[1], [0], [0], [1], [0, 0, 1, 1], [], []>} : vector<64x64xbf16>, vector<64x384xbf16>, vector<64x384xf32> -> vector<64x384xf32>
    %c0_9 = arith.constant 0 : index
    %c0_10 = arith.constant 0 : index
    %13 = vector.load %arg5[%c0_9, %c0_10] : memref<64x1xf32, #tpu.memory_space<vmem>>, vector<64x1xf32>
    %14 = vector.broadcast %13 : vector<64x1xf32> to vector<64x384xf32>
    %15 = arith.addf %12, %14 : vector<64x384xf32>
    %cst_11 = arith.constant 0.000000e+00 : f32
    %16 = vector.broadcast %cst_11 : f32 to vector<64x384xf32>
    %17 = arith.maximumf %15, %16 : vector<64x384xf32>
    %c0_12 = arith.constant 0 : index
    %c0_13 = arith.constant 0 : index
    %18 = vector.load %arg6[%c0_12, %c0_13] : memref<16x64xbf16, #tpu.memory_space<vmem>>, vector<16x64xbf16>
    %19 = arith.truncf %17 : vector<64x384xf32> to vector<64x384xbf16>
    %cst_14 = arith.constant dense<0.000000e+00> : vector<16x384xf32>
    %20 = tpu.matmul %18, %19, %cst_14 {dimension_numbers = #tpu.dot_dimension_numbers<[1], [0], [0], [1], [0, 0, 1, 1], [], []>} : vector<16x64xbf16>, vector<64x384xbf16>, vector<16x384xf32> -> vector<16x384xf32>
    %c0_15 = arith.constant 0 : index
    %c0_16 = arith.constant 0 : index
    %21 = vector.load %arg7[%c0_15, %c0_16] : memref<16x1xf32, #tpu.memory_space<vmem>>, vector<16x1xf32>
    %22 = vector.broadcast %21 : vector<16x1xf32> to vector<16x384xf32>
    %23 = arith.addf %20, %22 : vector<16x384xf32>
    %c0_17 = arith.constant 0 : index
    %c0_18 = arith.constant 0 : index
    %24 = vector.load %arg8[%c0_17, %c0_18] : memref<16x384xf32, #tpu.memory_space<vmem>>, vector<16x384xf32>
    tpu.vector_store %arg8[%c0_17, %c0_18], %23 {strides = array<i32>} : memref<16x384xf32, #tpu.memory_space<vmem>>, vector<16x384xf32>,
    return
  }
  func.func @transform_0(%arg0: i32) -> (i32, i32) {
    %c0_i32 = arith.constant 0 : i32
    %c0_i32_0 = arith.constant 0 : i32
    return %arg0, %c0_i32 : i32, i32
  }
  func.func @transform_1(%arg0: i32) -> (i32, i32) {
    %c0_i32 = arith.constant 0 : i32
    %c0_i32_0 = arith.constant 0 : i32
    %c0_i32_1 = arith.constant 0 : i32
    return %c0_i32, %c0_i32_0 : i32, i32
  }
  func.func @transform_2(%arg0: i32) -> (i32, i32) {
    %c0_i32 = arith.constant 0 : i32
    %c0_i32_0 = arith.constant 0 : i32
    %c0_i32_1 = arith.constant 0 : i32
    return %c0_i32, %c0_i32_0 : i32, i32
  }
  func.func @transform_3(%arg0: i32) -> (i32, i32) {
    %c0_i32 = arith.constant 0 : i32
    %c0_i32_0 = arith.constant 0 : i32
    %c0_i32_1 = arith.constant 0 : i32
    return %c0_i32, %c0_i32_0 : i32, i32
  }
  func.func @transform_4(%arg0: i32) -> (i32, i32) {
    %c0_i32 = arith.constant 0 : i32
    %c0_i32_0 = arith.constant 0 : i32
    %c0_i32_1 = arith.constant 0 : i32
    return %c0_i32, %c0_i32_0 : i32, i32
  }
  func.func @transform_5(%arg0: i32) -> (i32, i32) {
    %c0_i32 = arith.constant 0 : i32
    %c0_i32_0 = arith.constant 0 : i32
    %c0_i32_1 = arith.constant 0 : i32
    return %c0_i32, %c0_i32_0 : i32, i32
  }
  func.func @transform_6(%arg0: i32) -> (i32, i32) {
    %c0_i32 = arith.constant 0 : i32
    %c0_i32_0 = arith.constant 0 : i32
    %c0_i32_1 = arith.constant 0 : i32
    return %c0_i32, %c0_i32_0 : i32, i32
  }
  func.func @transform_7(%arg0: i32) -> (i32, i32) {
    %c0_i32 = arith.constant 0 : i32
    %c0_i32_0 = arith.constant 0 : i32
    return %c0_i32, %arg0 : i32, i32
  }
}

</mosaic_0001>

<llo_original>
// kernel: tpu_custom_call.1
$region0: #{tpu_custom_call.1}
  #allocation0 [shape = 'u32[]', space=smem, size = 0x4, offset = 0x4, fixed_abs, tag = 'smem constant byte address 0x4 - core index']
  #allocation1 [shape = 'u32[144,128]{1,0:T(1,128)}', space=vmem, size = 0x12000, scoped, tag = 'internal scratch']
  %s0 = inlined_call_operand.vmem [shape: f32[300,32], index: 0, kind: input, shape index: {}]
  %s1 = inlined_call_operand.vmem [shape: bf16[64,32], index: 1, kind: input, shape index: {}]
  %s2 = inlined_call_operand.vmem [shape: f32[64,1], index: 2, kind: input, shape index: {}]
  %s3 = inlined_call_operand.vmem [shape: bf16[64,64], index: 3, kind: input, shape index: {}]
  %s4 = inlined_call_operand.vmem [shape: f32[64,1], index: 4, kind: input, shape index: {}]
  %s5 = inlined_call_operand.vmem [shape: bf16[16,64], index: 5, kind: input, shape index: {}]
  %s6 = inlined_call_operand.vmem [shape: f32[16,1], index: 6, kind: input, shape index: {}]
  %s7 = inlined_call_operand.hbm [shape: f32[16,300], index: 7, kind: output, shape index: {}]
  %s8 = sld [smem:[#allocation0]]
  $region38: #{tpu_custom_call.1} parent=0
    _
  %s10 = ssub.s32 1, %s8
  %s11 = scalar_select 0, %s10, %s8
  $region1: #{tpu_custom_call.1} parent=0
    #allocation2 [shape = 'u8[24576]{0}', space=vmem, size = 0x6000, scoped, tag = 'output window, operand 0, single buffered']
    #allocation3 [shape = 's32[1]{0}', space=sflag, size = 0x4, scoped, tag = 'scoped memory for tpu_custom_call.1']
    %12 = vsyncpa [#allocation3], 0
    // Predicated region
    $region2: #{tpu_custom_call.1} parent=1 // pred_check
      _
    $region3: #{tpu_custom_call.1} parent=1 // pred_check_branch
      %14 = sbr.rel (0) target = $region5
    $region4: #{tpu_custom_call.1} parent=1 // pred_region
      _
    $region5: #{tpu_custom_call.1} parent=1 // pred_fallthru
      _
    // Predicated region
    $region6: #{tpu_custom_call.1} parent=1 // pred_check
      _
    $region7: #{tpu_custom_call.1} parent=1 // pred_check_branch
      %16 = sbr.rel (0) target = $region9
    $region8: #{tpu_custom_call.1} parent=1 // pred_region
      _
    $region9: #{tpu_custom_call.1} parent=1 // pred_fallthru
      _
    // Predicated region
    $region10: #{tpu_custom_call.1} parent=1 // pred_check
      _
    $region11: #{tpu_custom_call.1} parent=1 // pred_check_branch
      %18 = sbr.rel (0) target = $region13
    $region12: #{tpu_custom_call.1} parent=1 // pred_region
      _
    $region13: #{tpu_custom_call.1} parent=1 // pred_fallthru
      _
    // Predicated region
    $region14: #{tpu_custom_call.1} parent=1 // pred_check
      _
    $region15: #{tpu_custom_call.1} parent=1 // pred_check_branch
      %20 = sbr.rel (0) target = $region17
    $region16: #{tpu_custom_call.1} parent=1 // pred_region
      _
    $region17: #{tpu_custom_call.1} parent=1 // pred_fallthru
      _
    // Predicated region
    $region18: #{tpu_custom_call.1} parent=1 // pred_check
      _
    $region19: #{tpu_custom_call.1} parent=1 // pred_check_branch
      %22 = sbr.rel (0) target = $region21
    $region20: #{tpu_custom_call.1} parent=1 // pred_region
      _
    $region21: #{tpu_custom_call.1} parent=1 // pred_fallthru
      _
    // Predicated region
    $region22: #{tpu_custom_call.1} parent=1 // pred_check
      _
    $region23: #{tpu_custom_call.1} parent=1 // pred_check_branch
      %24 = sbr.rel (0) target = $region25
    $region24: #{tpu_custom_call.1} parent=1 // pred_region
      _
    $region25: #{tpu_custom_call.1} parent=1 // pred_fallthru
      _
    // Predicated region
    $region26: #{tpu_custom_call.1} parent=1 // pred_check
      _
    $region27: #{tpu_custom_call.1} parent=1 // pred_check_branch
      %26 = sbr.rel (0) target = $region29
    $region28: #{tpu_custom_call.1} parent=1 // pred_region
      _
    $region29: #{tpu_custom_call.1} parent=1 // pred_fallthru
      _
    %v28 = vld [vmem:[%s0] sm:$0xff]
    %v29 = vld [vmem:[%s0 + $0x8] sm:$0xff]
    %v30 = vld [vmem:[%s0 + $0x10] sm:$0xff]
    %v31 = vld [vmem:[%s0 + $0x18] sm:$0xff]
    %v32 = vld [vmem:[%s0 + $0x20] sm:$0xff]
    %v33 = vld [vmem:[%s0 + $0x28] sm:$0xff]
    %v34 = vld [vmem:[%s0 + $0x30] sm:$0xff]
    %v35 = vld [vmem:[%s0 + $0x38] sm:$0xff]
    %v36 = vld [vmem:[%s0 + $0x40] sm:$0xff]
    %v37 = vld [vmem:[%s0 + $0x48] sm:$0xff]
    %v38 = vld [vmem:[%s0 + $0x50] sm:$0xff]
    %v39 = vld [vmem:[%s0 + $0x58] sm:$0xff]
    %v40 = vld [vmem:[%s0 + $0x60] sm:$0xff]
    %v41 = vld [vmem:[%s0 + $0x68] sm:$0xff]
    %v42 = vld [vmem:[%s0 + $0x70] sm:$0xff]
    %v43 = vld [vmem:[%s0 + $0x78] sm:$0xff]
    %v44 = vld [vmem:[%s0 + $0x80] sm:$0xff]
    %v45 = vld [vmem:[%s0 + $0x88] sm:$0xff]
    %v46 = vld [vmem:[%s0 + $0x90] sm:$0xff]
    %v47 = vld [vmem:[%s0 + $0x98] sm:$0xff]
    %v48 = vld [vmem:[%s0 + $0xa0] sm:$0xff]
    %v49 = vld [vmem:[%s0 + $0xa8] sm:$0xff]
    %v50 = vld [vmem:[%s0 + $0xb0] sm:$0xff]
    %v51 = vld [vmem:[%s0 + $0xb8] sm:$0xff]
    %v52 = vld [vmem:[%s0 + $0xc0] sm:$0xff]
    %v53 = vld [vmem:[%s0 + $0xc8] sm:$0xff]
    %v54 = vld [vmem:[%s0 + $0xd0] sm:$0xff]
    %v55 = vld [vmem:[%s0 + $0xd8] sm:$0xff]
    %v56 = vld [vmem:[%s0 + $0xe0] sm:$0xff]
    %v57 = vld [vmem:[%s0 + $0xe8] sm:$0xff]
    %v58 = vld [vmem:[%s0 + $0xf0] sm:$0xff]
    %v59 = vld [vmem:[%s0 + $0xf8] sm:$0xff]
    %v60 = vld [vmem:[%s0 + $0x100] sm:$0xff]
    %v61 = vld [vmem:[%s0 + $0x108] sm:$0xff]
    %v62 = vld [vmem:[%s0 + $0x110] sm:$0xff]
    %v63 = vld [vmem:[%s0 + $0x118] sm:$0xff]
    %v64 = vld [vmem:[%s0 + $0x120] sm:$0xff]
    %v65 = vld [vmem:[%s0 + $0x128] sm:$0xff]
    %v66 = vld [vmem:[%s0 + $0x130] sm:$0xff]
    %v67 = vld [vmem:[%s0 + $0x138] sm:$0xff]
    %v68 = vld [vmem:[%s0 + $0x140] sm:$0xff]
    %v69 = vld [vmem:[%s0 + $0x148] sm:$0xff]
    %v70 = vld [vmem:[%s0 + $0x150] sm:$0xff]
    %v71 = vld [vmem:[%s0 + $0x158] sm:$0xff]
    %v72 = vld [vmem:[%s0 + $0x160] sm:$0xff]
    %v73 = vld [vmem:[%s0 + $0x168] sm:$0xff]
    %v74 = vld [vmem:[%s0 + $0x170] sm:$0xff]
    %v75 = vld [vmem:[%s0 + $0x178] sm:$0xff]
    %v76 = vpack.c.bf16 %v29, %v28
    %v77 = vpack.c.bf16 %v31, %v30
    %v78 = vpack.c.bf16 %v33, %v32
    %v79 = vpack.c.bf16 %v35, %v34
    %v80 = vpack.c.bf16 %v37, %v36
    %v81 = vpack.c.bf16 %v39, %v38
    %v82 = vpack.c.bf16 %v41, %v40
    %v83 = vpack.c.bf16 %v43, %v42
    %v84 = vpack.c.bf16 %v45, %v44
    %v85 = vpack.c.bf16 %v47, %v46
    %v86 = vpack.c.bf16 %v49, %v48
    %v87 = vpack.c.bf16 %v51, %v50
    %v88 = vpack.c.bf16 %v53, %v52
    %v89 = vpack.c.bf16 %v55, %v54
    %v90 = vpack.c.bf16 %v57, %v56
    %v91 = vpack.c.bf16 %v59, %v58
    %v92 = vpack.c.bf16 %v61, %v60
    %v93 = vpack.c.bf16 %v63, %v62
    %v94 = vpack.c.bf16 %v65, %v64
    %v95 = vpack.c.bf16 %v67, %v66
    %v96 = vpack.c.bf16 %v69, %v68
    %v97 = vpack.c.bf16 %v71, %v70
    %v98 = vpack.c.bf16 %v73, %v72
    %v99 = vpack.c.bf16 %v75, %v74
    %v100 = vld [vmem:[%s1] sm:$0xf]
    %v101 = vld [vmem:[%s1 + $0x4] sm:$0xf]
    %v102 = vld [vmem:[%s1 + $0x8] sm:$0xf]
    %v103 = vld [vmem:[%s1 + $0xc] sm:$0xf]
    %v104 = vld [vmem:[%s1 + $0x10] sm:$0xf]
    %v105 = vld [vmem:[%s1 + $0x14] sm:$0xf]
    %v106 = vld [vmem:[%s1 + $0x18] sm:$0xf]
    %v107 = vld [vmem:[%s1 + $0x1c] sm:$0xf]
    %v108 = vld [vmem:[%s2] sm:$0xff]
    %v109 = vld [vmem:[%s2 + $0x8] sm:$0xff]
    %v110 = vld [vmem:[%s2 + $0x10] sm:$0xff]
    %v111 = vld [vmem:[%s2 + $0x18] sm:$0xff]
    %v112 = vld [vmem:[%s2 + $0x20] sm:$0xff]
    %v113 = vld [vmem:[%s2 + $0x28] sm:$0xff]
    %v114 = vld [vmem:[%s2 + $0x30] sm:$0xff]
    %v115 = vld [vmem:[%s2 + $0x38] sm:$0xff]
    %117 = vset.pattern.permute.xlu0 0
    %118 = vperm.xlu0 %117, %v108
    %v119 = vpop.permute.xlu0 %118
    %122 = vset.pattern.permute.xlu0 0
    %123 = vperm.xlu0 %122, %v109
    %v124 = vpop.permute.xlu0 %123
    %127 = vset.pattern.permute.xlu0 0
    %128 = vperm.xlu0 %127, %v110
    %v129 = vpop.permute.xlu0 %128
    %132 = vset.pattern.permute.xlu0 0
    %133 = vperm.xlu0 %132, %v111
    %v134 = vpop.permute.xlu0 %133
    %137 = vset.pattern.permute.xlu0 0
    %138 = vperm.xlu0 %137, %v112
    %v139 = vpop.permute.xlu0 %138
    %142 = vset.pattern.permute.xlu0 0
    %143 = vperm.xlu0 %142, %v113
    %v144 = vpop.permute.xlu0 %143
    %147 = vset.pattern.permute.xlu0 0
    %148 = vperm.xlu0 %147, %v114
    %v149 = vpop.permute.xlu0 %148
    %152 = vset.pattern.permute.xlu0 0
    %153 = vperm.xlu0 %152, %v115
    %v154 = vpop.permute.xlu0 %153
    %v164 = vunpack.c.l.b16 %v100
    %v165 = vunpack.c.l.b16 %v101
    %v166 = vunpack.c.l.b16 %v102
    %v167 = vunpack.c.l.b16 %v103
    %v168 = vunpack.c.l.b16 %v104
    %v169 = vunpack.c.l.b16 %v105
    %v170 = vunpack.c.l.b16 %v106
    %v171 = vunpack.c.l.b16 %v107
    %v172 = vpack.c.b16 %v165, %v164
    %v173 = vpack.c.b16 %v167, %v166
    %v174 = vpack.c.b16 %v169, %v168
    %v175 = vpack.c.b16 %v171, %v170
    %vm176 = vcmask 261120
    %v178 = vsel %vm176, %v172, 0
    %v181 = vsel %vm176, %v173, 0
    %v184 = vsel %vm176, %v174, 0
    %v187 = vsel %vm176, %v175, 0
    %v190 = vsel %vm176, %v76, 0
    %v193 = vsel %vm176, %v77, 0
    %v196 = vsel %vm176, %v78, 0
    %v199 = vsel %vm176, %v79, 0
    %v202 = vsel %vm176, %v80, 0
    %v205 = vsel %vm176, %v81, 0
    %v208 = vsel %vm176, %v82, 0
    %v211 = vsel %vm176, %v83, 0
    %v214 = vsel %vm176, %v84, 0
    %v217 = vsel %vm176, %v85, 0
    %v220 = vsel %vm176, %v86, 0
    %v223 = vsel %vm176, %v87, 0
    %v226 = vsel %vm176, %v88, 0
    %v229 = vsel %vm176, %v89, 0
    %v232 = vsel %vm176, %v90, 0
    %v235 = vsel %vm176, %v91, 0
    %v238 = vsel %vm176, %v92, 0
    %v241 = vsel %vm176, %v93, 0
    %v244 = vsel %vm176, %v94, 0
    %v247 = vsel %vm176, %v95, 0
    %v250 = vsel %vm176, %v96, 0
    %v253 = vsel %vm176, %v97, 0
    %v256 = vsel %vm176, %v98, 0
    %v259 = vsel %vm176, %v99, 0
    %261 = vmatprep.subr.bf16.mxu0 0
    %262 = vmatpush1.bf16.xpose.msra.mxu0 %v211
    %263 = vmatprep.subr.bf16.mxu0 0
    %264 = vmatpush1.bf16.xpose.msra.mxu0 %v208
    %265 = vmatprep.subr.bf16.mxu0 0
    %266 = vmatpush1.bf16.xpose.msra.mxu0 %v205
    %267 = vmatprep.subr.bf16.mxu0 0
    %268 = vmatpush1.bf16.xpose.msra.mxu0 %v202
    %269 = vmatprep.subr.bf16.mxu0 0
    %270 = vmatpush1.bf16.xpose.msra.mxu0 %v199
    %271 = vmatprep.subr.bf16.mxu0 0
    %272 = vmatpush1.bf16.xpose.msra.mxu0 %v196
    %273 = vmatprep.subr.bf16.mxu0 0
    %274 = vmatpush1.bf16.xpose.msra.mxu0 %v193
    %275 = vmatprep.subr.bf16.mxu0 0
    %276 = vmatpush1.bf16.xpose.msra.mxu0 %v190
    %277 = vmatprep.subr.bf16.mxu0 0
    %278 = vmatpush2.bf16.xpose.msra.mxu0 %v235
    %279 = vmatprep.subr.bf16.mxu0 0
    %280 = vmatpush2.bf16.xpose.msra.mxu0 %v232
    %281 = vmatprep.subr.bf16.mxu0 0
    %282 = vmatpush2.bf16.xpose.msra.mxu0 %v229
    %283 = vmatprep.subr.bf16.mxu0 0
    %284 = vmatpush2.bf16.xpose.msra.mxu0 %v226
    %285 = vmatprep.subr.bf16.mxu0 0
    %286 = vmatpush2.bf16.xpose.msra.mxu0 %v223
    %287 = vmatprep.subr.bf16.mxu0 0
    %288 = vmatpush2.bf16.xpose.msra.mxu0 %v220
    %289 = vmatprep.subr.bf16.mxu0 0
    %290 = vmatpush2.bf16.xpose.msra.mxu0 %v217
    %291 = vmatprep.subr.bf16.mxu0 0
    %292 = vmatpush2.bf16.xpose.msra.mxu0 %v214
    %293 = vmatprep.mubr.bf16.mxu0 0
    %294 = vmatmul.mubr.bf16.gmra.mxu0 %v178
    %v295 = vpop.f32.mrf.mxu0
    %v296 = vadd.f32 %v119, %v295
    %v297 = vpop.f32.mrf.mxu0
    %v298 = vadd.f32 %v119, %v297
    %v299 = vpop.f32.mrf.mxu0
    %v300 = vadd.f32 %v124, %v299
    %v301 = vpop.f32.mrf.mxu0
    %v302 = vadd.f32 %v124, %v301
    %303 = vmatprep.mubr.bf16.mxu0 0
    %304 = vmatmul.mubr.bf16.gmra.mxu0 %v181
    %v305 = vpop.f32.mrf.mxu0
    %v306 = vadd.f32 %v129, %v305
    %v307 = vpop.f32.mrf.mxu0
    %v308 = vadd.f32 %v129, %v307
    %v309 = vpop.f32.mrf.mxu0
    %v310 = vadd.f32 %v134, %v309
    %v311 = vpop.f32.mrf.mxu0
    %v312 = vadd.f32 %v134, %v311
    %313 = vmatprep.mubr.bf16.mxu0 0
    %314 = vmatmul.mubr.bf16.gmra.mxu0 %v184
    %v315 = vpop.f32.mrf.mxu0
    %v316 = vadd.f32 %v139, %v315
    %v317 = vpop.f32.mrf.mxu0
    %v318 = vadd.f32 %v139, %v317
    %v319 = vpop.f32.mrf.mxu0
    %v320 = vadd.f32 %v144, %v319
    %v321 = vpop.f32.mrf.mxu0
    %v322 = vadd.f32 %v144, %v321
    %323 = vmatprep.mubr.bf16.mxu0 0
    %324 = vmatmul.mubr.bf16.gmra.mxu0 %v187
    %v325 = vpop.f32.mrf.mxu0
    %v326 = vadd.f32 %v149, %v325
    %v327 = vpop.f32.mrf.mxu0
    %v328 = vadd.f32 %v149, %v327
    %v329 = vpop.f32.mrf.mxu0
    %v330 = vadd.f32 %v154, %v329
    %v331 = vpop.f32.mrf.mxu0
    %v332 = vadd.f32 %v154, %v331
    %333 = vdwg.mxu0
    %334 = vmatprep.subr.bf16.mxu0 0
    %335 = vmatpush1.bf16.xpose.msra.mxu0 %v259
    %336 = vmatprep.subr.bf16.mxu0 0
    %337 = vmatpush1.bf16.xpose.msra.mxu0 %v256
    %338 = vmatprep.subr.bf16.mxu0 0
    %339 = vmatpush1.bf16.xpose.msra.mxu0 %v253
    %340 = vmatprep.subr.bf16.mxu0 0
    %341 = vmatpush1.bf16.xpose.msra.mxu0 %v250
    %342 = vmatprep.subr.bf16.mxu0 0
    %343 = vmatpush1.bf16.xpose.msra.mxu0 %v247
    %344 = vmatprep.subr.bf16.mxu0 0
    %345 = vmatpush1.bf16.xpose.msra.mxu0 %v244
    %346 = vmatprep.subr.bf16.mxu0 0
    %347 = vmatpush1.bf16.xpose.msra.mxu0 %v241
    %348 = vmatprep.subr.bf16.mxu0 0
    %349 = vmatpush1.bf16.xpose.msra.mxu0 %v238
    %350 = vmatprep.subr.bf16.mxu0 0
    %351 = vmatpush2.bf16.xpose.msra.mxu0 0
    %352 = vmatprep.subr.bf16.mxu0 0
    %353 = vmatpush2.bf16.xpose.msra.mxu0 0
    %354 = vmatprep.subr.bf16.mxu0 0
    %355 = vmatpush2.bf16.xpose.msra.mxu0 0
    %356 = vmatprep.subr.bf16.mxu0 0
    %357 = vmatpush2.bf16.xpose.msra.mxu0 0
    %358 = vmatprep.subr.bf16.mxu0 0
    %359 = vmatpush2.bf16.xpose.msra.mxu0 0
    %360 = vmatprep.subr.bf16.mxu0 0
    %361 = vmatpush2.bf16.xpose.msra.mxu0 0
    %362 = vmatprep.subr.bf16.mxu0 0
    %363 = vmatpush2.bf16.xpose.msra.mxu0 0
    %364 = vmatprep.subr.bf16.mxu0 0
    %365 = vmatpush2.bf16.xpose.msra.mxu0 0
    %366 = vmatprep.mubr.bf16.mxu0 0
    %367 = vmatmul.mubr.bf16.gmra.mxu0 %v178
    %v368 = vpop.f32.mrf.mxu0
    %v369 = vadd.f32 %v119, %v368
    %v370 = vpop.f32.mrf.mxu0
    %v371 = vpop.f32.mrf.mxu0
    %v372 = vadd.f32 %v124, %v371
    %v373 = vpop.f32.mrf.mxu0
    %374 = vmatprep.mubr.bf16.mxu0 0
    %375 = vmatmul.mubr.bf16.gmra.mxu0 %v181
    %v376 = vpop.f32.mrf.mxu0
    %v377 = vadd.f32 %v129, %v376
    %v378 = vpop.f32.mrf.mxu0
    %v379 = vpop.f32.mrf.mxu0
    %v380 = vadd.f32 %v134, %v379
    %v381 = vpop.f32.mrf.mxu0
    %382 = vmatprep.mubr.bf16.mxu0 0
    %383 = vmatmul.mubr.bf16.gmra.mxu0 %v184
    %v384 = vpop.f32.mrf.mxu0
    %v385 = vadd.f32 %v139, %v384
    %v386 = vpop.f32.mrf.mxu0
    %v387 = vpop.f32.mrf.mxu0
    %v388 = vadd.f32 %v144, %v387
    %v389 = vpop.f32.mrf.mxu0
    %390 = vmatprep.mubr.bf16.mxu0 0
    %391 = vmatmul.mubr.bf16.gmra.mxu0 %v187
    %v392 = vpop.f32.mrf.mxu0
    %v393 = vadd.f32 %v149, %v392
    %v394 = vpop.f32.mrf.mxu0
    %v395 = vpop.f32.mrf.mxu0
    %v396 = vadd.f32 %v154, %v395
    %v397 = vpop.f32.mrf.mxu0
    %398 = vdwg.mxu0
    %v399 = vmax.f32 %v296, 0.0
    %v400 = vmax.f32 %v298, 0.0
    %v401 = vmax.f32 %v369, 0.0
    %v402 = vmax.f32 %v300, 0.0
    %v403 = vmax.f32 %v302, 0.0
    %v404 = vmax.f32 %v372, 0.0
    %v405 = vmax.f32 %v306, 0.0
    %v406 = vmax.f32 %v308, 0.0
    %v407 = vmax.f32 %v377, 0.0
    %v408 = vmax.f32 %v310, 0.0
    %v409 = vmax.f32 %v312, 0.0
    %v410 = vmax.f32 %v380, 0.0
    %v411 = vmax.f32 %v316, 0.0
    %v412 = vmax.f32 %v318, 0.0
    %v413 = vmax.f32 %v385, 0.0
    %v414 = vmax.f32 %v320, 0.0
    %v415 = vmax.f32 %v322, 0.0
    %v416 = vmax.f32 %v388, 0.0
    %v417 = vmax.f32 %v326, 0.0
    %v418 = vmax.f32 %v328, 0.0
    %v419 = vmax.f32 %v393, 0.0
    %v420 = vmax.f32 %v330, 0.0
    %v421 = vmax.f32 %v332, 0.0
    %v422 = vmax.f32 %v396, 0.0
    %v423 = vld [vmem:[%s3] sm:$0xf]
    %v424 = vld [vmem:[%s3 + $0x4] sm:$0xf]
    %v425 = vld [vmem:[%s3 + $0x8] sm:$0xf]
    %v426 = vld [vmem:[%s3 + $0xc] sm:$0xf]
    %v427 = vld [vmem:[%s3 + $0x10] sm:$0xf]
    %v428 = vld [vmem:[%s3 + $0x14] sm:$0xf]
    %v429 = vld [vmem:[%s3 + $0x18] sm:$0xf]
    %v430 = vld [vmem:[%s3 + $0x1c] sm:$0xf]
    %v431 = vpack.c.bf16 %v402, %v399
    %v432 = vpack.c.bf16 %v403, %v400
    %v433 = vpack.c.bf16 %v404, %v401
    %v434 = vpack.c.bf16 %v408, %v405
    %v435 = vpack.c.bf16 %v409, %v406
    %v436 = vpack.c.bf16 %v410, %v407
    %v437 = vpack.c.bf16 %v414, %v411
    %v438 = vpack.c.bf16 %v415, %v412
    %v439 = vpack.c.bf16 %v416, %v413
    %v440 = vpack.c.bf16 %v420, %v417
    %v441 = vpack.c.bf16 %v421, %v418
    %v442 = vpack.c.bf16 %v422, %v419
    %v443 = vld [vmem:[%s4] sm:$0xff]
    %v444 = vld [vmem:[%s4 + $0x8] sm:$0xff]
    %v445 = vld [vmem:[%s4 + $0x10] sm:$0xff]
    %v446 = vld [vmem:[%s4 + $0x18] sm:$0xff]
    %v447 = vld [vmem:[%s4 + $0x20] sm:$0xff]
    %v448 = vld [vmem:[%s4 + $0x28] sm:$0xff]
    %v449 = vld [vmem:[%s4 + $0x30] sm:$0xff]
    %v450 = vld [vmem:[%s4 + $0x38] sm:$0xff]
    %452 = vset.pattern.permute.xlu0 0
    %453 = vperm.xlu0 %452, %v443
    %v454 = vpop.permute.xlu0 %453
    %457 = vset.pattern.permute.xlu0 0
    %458 = vperm.xlu0 %457, %v444
    %v459 = vpop.permute.xlu0 %458
    %462 = vset.pattern.permute.xlu0 0
    %463 = vperm.xlu0 %462, %v445
    %v464 = vpop.permute.xlu0 %463
    %467 = vset.pattern.permute.xlu0 0
    %468 = vperm.xlu0 %467, %v446
    %v469 = vpop.permute.xlu0 %468
    %472 = vset.pattern.permute.xlu0 0
    %473 = vperm.xlu0 %472, %v447
    %v474 = vpop.permute.xlu0 %473
    %477 = vset.pattern.permute.xlu0 0
    %478 = vperm.xlu0 %477, %v448
    %v479 = vpop.permute.xlu0 %478
    %482 = vset.pattern.permute.xlu0 0
    %483 = vperm.xlu0 %482, %v449
    %v484 = vpop.permute.xlu0 %483
    %487 = vset.pattern.permute.xlu0 0
    %488 = vperm.xlu0 %487, %v450
    %v489 = vpop.permute.xlu0 %488
    %v499 = vunpack.c.l.b16 %v423
    %v500 = vunpack.c.l.b16 %v424
    %v501 = vunpack.c.l.b16 %v425
    %v502 = vunpack.c.l.b16 %v426
    %v503 = vunpack.c.l.b16 %v427
    %v504 = vunpack.c.l.b16 %v428
    %v505 = vunpack.c.l.b16 %v429
    %v506 = vunpack.c.l.b16 %v430
    %v507 = vpack.c.b16 %v500, %v499
    %v508 = vpack.c.b16 %v502, %v501
    %v509 = vpack.c.b16 %v504, %v503
    %v510 = vpack.c.b16 %v506, %v505
    %vm511 = vcmask 523264
    %v513 = vsel %vm511, %v507, 0
    %v516 = vsel %vm511, %v508, 0
    %v519 = vsel %vm511, %v509, 0
    %v522 = vsel %vm511, %v510, 0
    %524 = vmatprep.subr.bf16.mxu0 0
    %525 = vmatpush1.bf16.msra.mxu0 0
    %526 = vmatprep.subr.bf16.mxu0 0
    %527 = vmatpush1.bf16.msra.mxu0 0
    %528 = vmatprep.subr.bf16.mxu0 0
    %529 = vmatpush1.bf16.msra.mxu0 0
    %530 = vmatprep.subr.bf16.mxu0 0
    %531 = vmatpush1.bf16.msra.mxu0 0
    %532 = vmatprep.subr.bf16.mxu0 %v441
    %533 = vmatpush1.bf16.msra.mxu0 %v440
    %534 = vmatprep.subr.bf16.mxu0 %v438
    %535 = vmatpush1.bf16.msra.mxu0 %v437
    %536 = vmatprep.subr.bf16.mxu0 %v435
    %537 = vmatpush1.bf16.msra.mxu0 %v434
    %538 = vmatprep.subr.bf16.mxu0 %v432
    %539 = vmatpush1.bf16.msra.mxu0 %v431
    %540 = vmatprep.subr.bf16.mxu0 0
    %541 = vmatpush2.bf16.msra.mxu0 0
    %542 = vmatprep.subr.bf16.mxu0 0
    %543 = vmatpush2.bf16.msra.mxu0 0
    %544 = vmatprep.subr.bf16.mxu0 0
    %545 = vmatpush2.bf16.msra.mxu0 0
    %546 = vmatprep.subr.bf16.mxu0 0
    %547 = vmatpush2.bf16.msra.mxu0 0
    %548 = vmatprep.subr.bf16.mxu0 0
    %549 = vmatpush2.bf16.msra.mxu0 0
    %550 = vmatprep.subr.bf16.mxu0 0
    %551 = vmatpush2.bf16.msra.mxu0 0
    %552 = vmatprep.subr.bf16.mxu0 0
    %553 = vmatpush2.bf16.msra.mxu0 0
    %554 = vmatprep.subr.bf16.mxu0 0
    %555 = vmatpush2.bf16.msra.mxu0 0
    %556 = vmatprep.mubr.bf16.mxu0 0
    %557 = vmatmul.mubr.bf16.gmra.mxu0 %v513
    %v558 = vpop.f32.mrf.mxu0
    %v559 = vadd.f32 %v454, %v558
    %v560 = vpop.f32.mrf.mxu0
    %v561 = vadd.f32 %v454, %v560
    %v562 = vpop.f32.mrf.mxu0
    %v563 = vadd.f32 %v459, %v562
    %v564 = vpop.f32.mrf.mxu0
    %v565 = vadd.f32 %v459, %v564
    %566 = vmatprep.mubr.bf16.mxu0 0
    %567 = vmatmul.mubr.bf16.gmra.mxu0 %v516
    %v568 = vpop.f32.mrf.mxu0
    %v569 = vadd.f32 %v464, %v568
    %v570 = vpop.f32.mrf.mxu0
    %v571 = vadd.f32 %v464, %v570
    %v572 = vpop.f32.mrf.mxu0
    %v573 = vadd.f32 %v469, %v572
    %v574 = vpop.f32.mrf.mxu0
    %v575 = vadd.f32 %v469, %v574
    %576 = vmatprep.mubr.bf16.mxu0 0
    %577 = vmatmul.mubr.bf16.gmra.mxu0 %v519
    %v578 = vpop.f32.mrf.mxu0
    %v579 = vadd.f32 %v474, %v578
    %v580 = vpop.f32.mrf.mxu0
    %v581 = vadd.f32 %v474, %v580
    %v582 = vpop.f32.mrf.mxu0
    %v583 = vadd.f32 %v479, %v582
    %v584 = vpop.f32.mrf.mxu0
    %v585 = vadd.f32 %v479, %v584
    %586 = vmatprep.mubr.bf16.mxu0 0
    %587 = vmatmul.mubr.bf16.gmra.mxu0 %v522
    %v588 = vpop.f32.mrf.mxu0
    %v589 = vadd.f32 %v484, %v588
    %v590 = vpop.f32.mrf.mxu0
    %v591 = vadd.f32 %v484, %v590
    %v592 = vpop.f32.mrf.mxu0
    %v593 = vadd.f32 %v489, %v592
    %v594 = vpop.f32.mrf.mxu0
    %v595 = vadd.f32 %v489, %v594
    %596 = vdwg.mxu0
    %597 = vmatprep.subr.bf16.mxu0 0
    %598 = vmatpush1.bf16.msra.mxu0 0
    %599 = vmatprep.subr.bf16.mxu0 0
    %600 = vmatpush1.bf16.msra.mxu0 0
    %601 = vmatprep.subr.bf16.mxu0 0
    %602 = vmatpush1.bf16.msra.mxu0 0
    %603 = vmatprep.subr.bf16.mxu0 0
    %604 = vmatpush1.bf16.msra.mxu0 0
    %605 = vmatprep.subr.bf16.mxu0 0
    %606 = vmatpush1.bf16.msra.mxu0 %v442
    %607 = vmatprep.subr.bf16.mxu0 0
    %608 = vmatpush1.bf16.msra.mxu0 %v439
    %609 = vmatprep.subr.bf16.mxu0 0
    %610 = vmatpush1.bf16.msra.mxu0 %v436
    %611 = vmatprep.subr.bf16.mxu0 0
    %612 = vmatpush1.bf16.msra.mxu0 %v433
    %613 = vmatprep.subr.bf16.mxu0 0
    %614 = vmatpush2.bf16.msra.mxu0 0
    %615 = vmatprep.subr.bf16.mxu0 0
    %616 = vmatpush2.bf16.msra.mxu0 0
    %617 = vmatprep.subr.bf16.mxu0 0
    %618 = vmatpush2.bf16.msra.mxu0 0
    %619 = vmatprep.subr.bf16.mxu0 0
    %620 = vmatpush2.bf16.msra.mxu0 0
    %621 = vmatprep.subr.bf16.mxu0 0
    %622 = vmatpush2.bf16.msra.mxu0 0
    %623 = vmatprep.subr.bf16.mxu0 0
    %624 = vmatpush2.bf16.msra.mxu0 0
    %625 = vmatprep.subr.bf16.mxu0 0
    %626 = vmatpush2.bf16.msra.mxu0 0
    %627 = vmatprep.subr.bf16.mxu0 0
    %628 = vmatpush2.bf16.msra.mxu0 0
    %629 = vmatprep.mubr.bf16.mxu0 0
    %630 = vmatmul.mubr.bf16.gmra.mxu0 %v513
    %v631 = vpop.f32.mrf.mxu0
    %v632 = vadd.f32 %v454, %v631
    %v633 = vpop.f32.mrf.mxu0
    %v634 = vpop.f32.mrf.mxu0
    %v635 = vadd.f32 %v459, %v634
    %v636 = vpop.f32.mrf.mxu0
    %637 = vmatprep.mubr.bf16.mxu0 0
    %638 = vmatmul.mubr.bf16.gmra.mxu0 %v516
    %v639 = vpop.f32.mrf.mxu0
    %v640 = vadd.f32 %v464, %v639
    %v641 = vpop.f32.mrf.mxu0
    %v642 = vpop.f32.mrf.mxu0
    %v643 = vadd.f32 %v469, %v642
    %v644 = vpop.f32.mrf.mxu0
    %645 = vmatprep.mubr.bf16.mxu0 0
    %646 = vmatmul.mubr.bf16.gmra.mxu0 %v519
    %v647 = vpop.f32.mrf.mxu0
    %v648 = vadd.f32 %v474, %v647
    %v649 = vpop.f32.mrf.mxu0
    %v650 = vpop.f32.mrf.mxu0
    %v651 = vadd.f32 %v479, %v650
    %v652 = vpop.f32.mrf.mxu0
    %653 = vmatprep.mubr.bf16.mxu0 0
    %654 = vmatmul.mubr.bf16.gmra.mxu0 %v522
    %v655 = vpop.f32.mrf.mxu0
    %v656 = vadd.f32 %v484, %v655
    %v657 = vpop.f32.mrf.mxu0
    %v658 = vpop.f32.mrf.mxu0
    %v659 = vadd.f32 %v489, %v658
    %v660 = vpop.f32.mrf.mxu0
    %661 = vdwg.mxu0
    %v662 = vmax.f32 %v559, 0.0
    %v663 = vmax.f32 %v561, 0.0
    %v664 = vmax.f32 %v632, 0.0
    %v665 = vmax.f32 %v563, 0.0
    %v666 = vmax.f32 %v565, 0.0
    %v667 = vmax.f32 %v635, 0.0
    %v668 = vmax.f32 %v569, 0.0
    %v669 = vmax.f32 %v571, 0.0
    %v670 = vmax.f32 %v640, 0.0
    %v671 = vmax.f32 %v573, 0.0
    %v672 = vmax.f32 %v575, 0.0
    %v673 = vmax.f32 %v643, 0.0
    %v674 = vmax.f32 %v579, 0.0
    %v675 = vmax.f32 %v581, 0.0
    %v676 = vmax.f32 %v648, 0.0
    %v677 = vmax.f32 %v583, 0.0
    %v678 = vmax.f32 %v585, 0.0
    %v679 = vmax.f32 %v651, 0.0
    %v680 = vmax.f32 %v589, 0.0
    %v681 = vmax.f32 %v591, 0.0
    %v682 = vmax.f32 %v656, 0.0
    %v683 = vmax.f32 %v593, 0.0
    %v684 = vmax.f32 %v595, 0.0
    %v685 = vmax.f32 %v659, 0.0
    %v686 = vld [vmem:[%s5] sm:$0xf]
    %v687 = vld [vmem:[%s5 + $0x4] sm:$0xf]
    %v688 = vpack.c.bf16 %v665, %v662
    %v689 = vpack.c.bf16 %v666, %v663
    %v690 = vpack.c.bf16 %v667, %v664
    %v691 = vpack.c.bf16 %v671, %v668
    %v692 = vpack.c.bf16 %v672, %v669
    %v693 = vpack.c.bf16 %v673, %v670
    %v694 = vpack.c.bf16 %v677, %v674
    %v695 = vpack.c.bf16 %v678, %v675
    %v696 = vpack.c.bf16 %v679, %v676
    %v697 = vpack.c.bf16 %v683, %v680
    %v698 = vpack.c.bf16 %v684, %v681
    %v699 = vpack.c.bf16 %v685, %v682
    %v700 = vld [vmem:[%s6] sm:$0xff]
    %v701 = vld [vmem:[%s6 + $0x8] sm:$0xff]
    %703 = vset.pattern.permute.xlu0 0
    %704 = vperm.xlu0 %703, %v700
    %v705 = vpop.permute.xlu0 %704
    %708 = vset.pattern.permute.xlu0 0
    %709 = vperm.xlu0 %708, %v701
    %v710 = vpop.permute.xlu0 %709
    %v714 = vunpack.c.l.b16 %v686
    %v715 = vunpack.c.l.b16 %v687
    %v716 = vpack.c.b16 %v715, %v714
    %v718 = vsel %vm511, %v716, 0
    %720 = vmatprep.subr.bf16.mxu0 0
    %721 = vmatpush1.bf16.msra.mxu0 0
    %722 = vmatprep.subr.bf16.mxu0 0
    %723 = vmatpush1.bf16.msra.mxu0 0
    %724 = vmatprep.subr.bf16.mxu0 0
    %725 = vmatpush1.bf16.msra.mxu0 0
    %726 = vmatprep.subr.bf16.mxu0 0
    %727 = vmatpush1.bf16.msra.mxu0 0
    %728 = vmatprep.subr.bf16.mxu0 %v698
    %729 = vmatpush1.bf16.msra.mxu0 %v697
    %730 = vmatprep.subr.bf16.mxu0 %v695
    %731 = vmatpush1.bf16.msra.mxu0 %v694
    %732 = vmatprep.subr.bf16.mxu0 %v692
    %733 = vmatpush1.bf16.msra.mxu0 %v691
    %734 = vmatprep.subr.bf16.mxu0 %v689
    %735 = vmatpush1.bf16.msra.mxu0 %v688
    %736 = vmatprep.subr.bf16.mxu0 0
    %737 = vmatpush2.bf16.msra.mxu0 0
    %738 = vmatprep.subr.bf16.mxu0 0
    %739 = vmatpush2.bf16.msra.mxu0 0
    %740 = vmatprep.subr.bf16.mxu0 0
    %741 = vmatpush2.bf16.msra.mxu0 0
    %742 = vmatprep.subr.bf16.mxu0 0
    %743 = vmatpush2.bf16.msra.mxu0 0
    %744 = vmatprep.subr.bf16.mxu0 0
    %745 = vmatpush2.bf16.msra.mxu0 0
    %746 = vmatprep.subr.bf16.mxu0 0
    %747 = vmatpush2.bf16.msra.mxu0 0
    %748 = vmatprep.subr.bf16.mxu0 0
    %749 = vmatpush2.bf16.msra.mxu0 0
    %750 = vmatprep.subr.bf16.mxu0 0
    %751 = vmatpush2.bf16.msra.mxu0 0
    %752 = vmatprep.mubr.bf16.mxu0 0
    %753 = vmatmul.mubr.bf16.gmra.mxu0 %v718
    %v754 = vpop.f32.mrf.mxu0
    %v755 = vadd.f32 %v705, %v754
    %v756 = vpop.f32.mrf.mxu0
    %v757 = vadd.f32 %v705, %v756
    %v758 = vpop.f32.mrf.mxu0
    %v759 = vadd.f32 %v710, %v758
    %v760 = vpop.f32.mrf.mxu0
    %v761 = vadd.f32 %v710, %v760
    %762 = vdwg.mxu0
    %763 = vmatprep.subr.bf16.mxu0 0
    %764 = vmatpush1.bf16.msra.mxu0 0
    %765 = vmatprep.subr.bf16.mxu0 0
    %766 = vmatpush1.bf16.msra.mxu0 0
    %767 = vmatprep.subr.bf16.mxu0 0
    %768 = vmatpush1.bf16.msra.mxu0 0
    %769 = vmatprep.subr.bf16.mxu0 0
    %770 = vmatpush1.bf16.msra.mxu0 0
    %771 = vmatprep.subr.bf16.mxu0 0
    %772 = vmatpush1.bf16.msra.mxu0 %v699
    %773 = vmatprep.subr.bf16.mxu0 0
    %774 = vmatpush1.bf16.msra.mxu0 %v696
    %775 = vmatprep.subr.bf16.mxu0 0
    %776 = vmatpush1.bf16.msra.mxu0 %v693
    %777 = vmatprep.subr.bf16.mxu0 0
    %778 = vmatpush1.bf16.msra.mxu0 %v690
    %779 = vmatprep.subr.bf16.mxu0 0
    %780 = vmatpush2.bf16.msra.mxu0 0
    %781 = vmatprep.subr.bf16.mxu0 0
    %782 = vmatpush2.bf16.msra.mxu0 0
    %783 = vmatprep.subr.bf16.mxu0 0
    %784 = vmatpush2.bf16.msra.mxu0 0
    %785 = vmatprep.subr.bf16.mxu0 0
    %786 = vmatpush2.bf16.msra.mxu0 0
    %787 = vmatprep.subr.bf16.mxu0 0
    %788 = vmatpush2.bf16.msra.mxu0 0
    %789 = vmatprep.subr.bf16.mxu0 0
    %790 = vmatpush2.bf16.msra.mxu0 0
    %791 = vmatprep.subr.bf16.mxu0 0
    %792 = vmatpush2.bf16.msra.mxu0 0
    %793 = vmatprep.subr.bf16.mxu0 0
    %794 = vmatpush2.bf16.msra.mxu0 0
    %795 = vmatprep.mubr.bf16.mxu0 0
    %796 = vmatmul.mubr.bf16.gmra.mxu0 %v718
    %v797 = vpop.f32.mrf.mxu0
    %v798 = vadd.f32 %v705, %v797
    %v799 = vpop.f32.mrf.mxu0
    %v800 = vpop.f32.mrf.mxu0
    %v801 = vadd.f32 %v710, %v800
    %v802 = vpop.f32.mrf.mxu0
    %803 = vdwg.mxu0
    %804 = vst [vmem:[#allocation2] sm:$0xff] %v755
    %805 = vst [vmem:[#allocation2 + $0x8] sm:$0xff] %v757
    %806 = vst [vmem:[#allocation2 + $0x10] sm:$0xff] %v798
    %807 = vst [vmem:[#allocation2 + $0x18] sm:$0xff] %v759
    %808 = vst [vmem:[#allocation2 + $0x20] sm:$0xff] %v761
    %809 = vst [vmem:[#allocation2 + $0x28] sm:$0xff] %v801
    // Predicated region
    $region30: #{tpu_custom_call.1} parent=1 // pred_check
      _
    $region31: #{tpu_custom_call.1} parent=1 // pred_check_branch
      %811 = sbr.rel (0) target = $region33
    $region32: #{tpu_custom_call.1} parent=1 // pred_region
      %s813 = ssub.s32 768, 768
      %814 = vsyncadd [#allocation3], %s813
      %s815 = sshll.u32 [#allocation2], 4
      %s816 = int_to_ptr.vmem [resolvable:$true] %s815
      %821 = dma.vmem_to_hbm [thread:$0]  %s816, 768, %s7, [#allocation3], 384, 384, 24
    $region33: #{tpu_custom_call.1} parent=1 // pred_fallthru
      _
    // Predicated region
    $region34: #{tpu_custom_call.1} parent=1 // pred_check
      _
    $region35: #{tpu_custom_call.1} parent=1 // pred_check_branch
      %823 = sbr.rel (0) target = $region37
    $region36: #{tpu_custom_call.1} parent=1 // pred_region
      %824 = dma.done [#allocation3], 768
    $region37: #{tpu_custom_call.1} parent=1 // pred_fallthru
      _
    %825 = vsyncpa [#allocation3], 1

</llo_original>
